<compile_context>
chip_gen: v6e
topology: v6e:2x2x1
jax: 0.10.0
libtpu: 0.0.40
codegen_flags: <defaults>
</compile_context>

<pallas_src>
import jax
import jax.numpy as jnp
from jax.experimental import pallas as pl
from jax.experimental.pallas import tpu as pltpu

# Config matching TextClassifier(net_type='CNN', embedding_dim=VOCAB,
# hidden_size=H, num_classes=C, model_name=None)
VOCAB = 100
H = 32              # hidden_size
K = 3               # Conv1d kernel_size
B = 2               # batch
S = H + K - 1       # seq length; module requires S - K + 1 == hidden_size for fc
LP = S - K + 1      # conv output length (== H)
C = 5               # num_classes

KV = K * VOCAB      # 300  (one-hot / block-diag table rows)
KH = K * H          # 96   (im2col width / block-diag table cols)
BLP = B * LP        # 64
BC = B * C          # 10

# Packed f32 parameter buffer layout (all row offsets multiples of 8, lane offset 0).
P_COLS = BLP                      # 64 lanes (widest block: the fc block-diag weight)
P_WFC_ROW = 0                     # rows 0..9,    cols 0..63 : kron(eye(B), w_fc)
P_WCONV_ROW = 16                  # rows 16..111, cols 0..31 : w_conv as (K*H, H)
P_BCONV_ROW = P_WCONV_ROW + KH    # row 112,      cols 0..31 : b_conv
P_BFC_ROW = 120                   # rows 120..129, col 0     : b_fc (per-batch-replicated)
P_ROWS = 136                      # padded to a multiple of 8

_FLOPS = 2 * (BLP * KV * KH + BLP * KH * H + BC * BLP * H)
_BYTES = BLP * K * 4 + KV * KH * 4 + P_ROWS * P_COLS * 4 + BC * H * 4


def _text_classifier_cnn_kernel(win_ref, table_ref, params_ref, out_ref):
    # win_ref:    (B*LP, K)       int32  win[r, k] = token_ids[b, t+k] + k*VOCAB, r = b*LP + t
    # table_ref:  (K*VOCAB, K*H)  f32    blockdiag(table, table, table)
    # params_ref: (P_ROWS, 64)    f32    packed wconv / bconv / wfc-blockdiag / bfc
    # out_ref:    (B*C, H)        f32    out[b*C + c, o] == torch_out[b, o, c]

    # --- Embedding gather + im2col fused: one-hot already in im2col layout -----
    # Each row has exactly K hits, each landing in its own VOCAB-wide segment, so
    # the block-diagonal table matmul yields im2col rows with no in-kernel shuffles.
    win = win_ref[...]                                                   # (B*LP, K)
    iota = jax.lax.broadcasted_iota(jnp.int32, (BLP, KV), 1)             # (B*LP, K*VOCAB)
    hit = iota == win[:, 0:1]
    for k in range(1, K):
        hit = jnp.logical_or(hit, iota == win[:, k:k + 1])
    onehot = hit.astype(jnp.float32)                                     # (B*LP, K*VOCAB)
    im2col = jnp.dot(onehot, table_ref[...],
                     preferred_element_type=jnp.float32)                 # (B*LP, K*H)

    # --- Conv1d(kernel_size=3) as ONE matmul; bias + ReLU on the VPU ------------
    wconv = params_ref[P_WCONV_ROW:P_WCONV_ROW + KH, 0:H]                # (K*H, H)
    bconv = params_ref[P_BCONV_ROW:P_BCONV_ROW + 1, 0:H]                 # (1, H)
    act = jnp.maximum(
        jnp.dot(im2col, wconv, preferred_element_type=jnp.float32) + bconv, 0.0)

    # --- fc over the conv length axis as ONE matmul (block-diagonal weight) -----
    wfc = params_ref[P_WFC_ROW:P_WFC_ROW + BC, 0:BLP]                    # (B*C, B*LP)
    bfc = params_ref[P_BFC_ROW:P_BFC_ROW + BC, 0:1]                      # (B*C, 1)
    out_ref[...] = jnp.dot(wfc, act, preferred_element_type=jnp.float32) + bfc


def pack_text_classifier_cnn_params(emb_table, w_conv, b_conv, w_fc, b_fc):
    """One-time parameter packing (pure layout/replication; hoist to init time).

    Returns:
      table_bd: (K*VOCAB, K*H) f32  block-diagonal replicated embedding table
      params:   (P_ROWS, 64)   f32  single packed buffer for all conv/fc weights
    """
    table_bd = jnp.kron(jnp.eye(K, dtype=jnp.float32),
                        emb_table.astype(jnp.float32))                    # (300, 96)
    wconv_packed = jnp.transpose(w_conv, (2, 1, 0)).reshape(KH, H)        # (96, 32)
    wfc_block = jnp.kron(jnp.eye(B, dtype=jnp.float32),
                         w_fc.astype(jnp.float32))                        # (10, 64)
    # TODO(synk): kron(eye(B), w_fc) is O(B^2); switch to per-batch matmuls if B grows.
    params = jnp.zeros((P_ROWS, P_COLS), jnp.float32)
    params = params.at[P_WFC_ROW:P_WFC_ROW + BC, 0:BLP].set(wfc_block)
    params = params.at[P_WCONV_ROW:P_WCONV_ROW + KH, 0:H].set(wconv_packed)
    params = params.at[P_BCONV_ROW, 0:H].set(b_conv.astype(jnp.float32))
    params = params.at[P_BFC_ROW:P_BFC_ROW + BC, 0].set(
        jnp.tile(b_fc.astype(jnp.float32), B))
    return table_bd, params


@jax.jit
def text_classifier_cnn_forward_packed(token_ids, table_bd, params):
    """Steady-state forward: token_ids (B, S) int32 -> (B, H, C) f32."""
    tok = jnp.clip(token_ids.astype(jnp.int32), 0, VOCAB - 1)
    # im2col'd window indices, each tap shifted into its own VOCAB-wide segment.
    win = jnp.stack([tok[:, k:k + LP] + k * VOCAB for k in range(K)], axis=-1)
    win = win.reshape(BLP, K)                                             # (B*LP, K)

    out = pl.pallas_call(
        _text_classifier_cnn_kernel,
        out_shape=jax.ShapeDtypeStruct((BC, H), jnp.float32),
        in_specs=[pl.BlockSpec(memory_space=pltpu.MemorySpace.VMEM)
                  for _ in range(3)],
        out_specs=pl.BlockSpec(memory_space=pltpu.MemorySpace.VMEM),
        cost_estimate=pl.CostEstimate(flops=_FLOPS, transcendentals=0,
                                      bytes_accessed=_BYTES),
    )(win, table_bd, params)

    # (B*C, H) -> (B, H, C); kept outside so the kernel store stays lane-dense.
    return out.reshape(B, C, H).transpose(0, 2, 1)


def text_classifier_cnn_forward(token_ids, emb_table, w_conv, b_conv, w_fc, b_fc):
    """Convenience wrapper: packs params (one-time cost) then runs the jitted path."""
    table_bd, params = pack_text_classifier_cnn_params(
        emb_table, w_conv, b_conv, w_fc, b_fc)
    return text_classifier_cnn_forward_packed(token_ids, table_bd, params)


def _reference_forward(token_ids, emb_table, w_conv, b_conv, w_fc, b_fc):
    """Pure-JAX reference mirroring the PyTorch forward exactly."""
    emb = jnp.take(emb_table, token_ids, axis=0)           # (B, S, H)
    xt = jnp.transpose(emb, (0, 2, 1))                     # (B, H, S)  (NCL)
    conv = b_conv[None, :, None] + sum(
        jnp.einsum('oi,bit->bot', w_conv[:, :, k], xt[:, :, k:k + LP])
        for k in range(K))                                 # (B, H, LP)
    relu = jnp.maximum(conv, 0.0)
    return jnp.einsum('bht,ct->bhc', relu, w_fc) + b_fc    # (B, H, C)


if __name__ == "__main__":
    key = jax.random.PRNGKey(0)
    k_tok, k_emb, k_wc, k_bc, k_wf, k_bf = jax.random.split(key, 6)

    token_ids = jax.random.randint(k_tok, (B, S), 0, VOCAB, dtype=jnp.int32)
    emb_table = jax.random.normal(k_emb, (VOCAB, H), jnp.float32)
    # Deterministic, roughly PyTorch-scaled uniform init for Conv1d / Linear params.
    conv_bound = 1.0 / (H * K) ** 0.5
    w_conv = jax.random.uniform(k_wc, (H, H, K), jnp.float32, -conv_bound, conv_bound)
    b_conv = jax.random.uniform(k_bc, (H,), jnp.float32, -conv_bound, conv_bound)
    fc_bound = 1.0 / H ** 0.5
    w_fc = jax.random.uniform(k_wf, (C, H), jnp.float32, -fc_bound, fc_bound)
    b_fc = jax.random.uniform(k_bf, (C,), jnp.float32, -fc_bound, fc_bound)

    # One-time packing (hoisted out of the steady-state path), then jitted forward.
    table_bd, params = pack_text_classifier_cnn_params(
        emb_table, w_conv, b_conv, w_fc, b_fc)
    out = text_classifier_cnn_forward_packed(token_ids, table_bd, params)
    out = jax.block_until_ready(out)

    ref = _reference_forward(token_ids, emb_table, w_conv, b_conv, w_fc, b_fc)
    assert out.shape == (B, H, C)
    assert jnp.allclose(out, ref, atol=1e-4, rtol=1e-4), "mismatch vs reference"
    print("KERNEL_OK")
</pallas_src>

<mosaic_0001>
module attributes {stable_mosaic.version = 11 : i64} {
  func.func @_text_classifier_cnn_kernel(%arg0: memref<64x3xi32, #tpu.memory_space<vmem>>, %arg1: memref<300x96xf32, #tpu.memory_space<vmem>>, %arg2: memref<136x64xf32, #tpu.memory_space<vmem>>, %arg3: memref<10x32xf32, #tpu.memory_space<vmem>>) attributes {dimension_semantics = [], scalar_prefetch = 0 : i64, scratch_operands = 0 : i64, tpu.core_type = #tpu.core_type<tc>} {
    %c0 = arith.constant 0 : index
    %c0_0 = arith.constant 0 : index
    %0 = vector.load %arg0[%c0, %c0_0] : memref<64x3xi32, #tpu.memory_space<vmem>>, vector<64x3xi32>
    %1 = tpu.iota {dimensions = array<i32: 1>} : vector<64x300xi32>
    %2 = vector.extract_strided_slice %0 {offsets = [0, 0], sizes = [64, 1], strides = [1, 1]} : vector<64x3xi32> to vector<64x1xi32>
    %3 = vector.broadcast %2 : vector<64x1xi32> to vector<64x300xi32>
    %4 = arith.cmpi eq, %1, %3 : vector<64x300xi32>
    %5 = vector.extract_strided_slice %0 {offsets = [0, 1], sizes = [64, 1], strides = [1, 1]} : vector<64x3xi32> to vector<64x1xi32>
    %6 = vector.broadcast %5 : vector<64x1xi32> to vector<64x300xi32>
    %7 = arith.cmpi eq, %1, %6 : vector<64x300xi32>
    %8 = arith.ori %4, %7 : vector<64x300xi1>
    %9 = vector.extract_strided_slice %0 {offsets = [0, 2], sizes = [64, 1], strides = [1, 1]} : vector<64x3xi32> to vector<64x1xi32>
    %10 = vector.broadcast %9 : vector<64x1xi32> to vector<64x300xi32>
    %11 = arith.cmpi eq, %1, %10 : vector<64x300xi32>
    %12 = arith.ori %8, %11 : vector<64x300xi1>
    %13 = arith.extui %12 : vector<64x300xi1> to vector<64x300xi32>
    %14 = arith.sitofp %13 : vector<64x300xi32> to vector<64x300xf32>
    %c0_1 = arith.constant 0 : index
    %c0_2 = arith.constant 0 : index
    %15 = vector.load %arg1[%c0_1, %c0_2] : memref<300x96xf32, #tpu.memory_space<vmem>>, vector<300x96xf32>
    %cst = arith.constant dense<0.000000e+00> : vector<64x96xf32>
    %16 = tpu.matmul %14, %15, %cst {dimension_numbers = #tpu.dot_dimension_numbers<[1], [0], [0], [1], [0, 0, 1, 1], [], []>} : vector<64x300xf32>, vector<300x96xf32>, vector<64x96xf32> -> vector<64x96xf32>
    %c16 = arith.constant 16 : index
    %c0_3 = arith.constant 0 : index
    %17 = vector.load %arg2[%c16, %c0_3] : memref<136x64xf32, #tpu.memory_space<vmem>>, vector<96x32xf32>
    %c112 = arith.constant 112 : index
    %c0_4 = arith.constant 0 : index
    %18 = vector.load %arg2[%c112, %c0_4] : memref<136x64xf32, #tpu.memory_space<vmem>>, vector<1x32xf32>
    %cst_5 = arith.constant dense<0.000000e+00> : vector<64x32xf32>
    %19 = tpu.matmul %16, %17, %cst_5 {dimension_numbers = #tpu.dot_dimension_numbers<[1], [0], [0], [1], [0, 0, 1, 1], [], []>} : vector<64x96xf32>, vector<96x32xf32>, vector<64x32xf32> -> vector<64x32xf32>
    %20 = vector.broadcast %18 : vector<1x32xf32> to vector<64x32xf32>
    %21 = arith.addf %19, %20 : vector<64x32xf32>
    %cst_6 = arith.constant 0.000000e+00 : f32
    %22 = vector.broadcast %cst_6 : f32 to vector<64x32xf32>
    %23 = arith.maximumf %21, %22 : vector<64x32xf32>
    %c0_7 = arith.constant 0 : index
    %c0_8 = arith.constant 0 : index
    %24 = vector.load %arg2[%c0_7, %c0_8] : memref<136x64xf32, #tpu.memory_space<vmem>>, vector<10x64xf32>
    %c120 = arith.constant 120 : index
    %c0_9 = arith.constant 0 : index
    %25 = vector.load %arg2[%c120, %c0_9] : memref<136x64xf32, #tpu.memory_space<vmem>>, vector<10x1xf32>
    %cst_10 = arith.constant dense<0.000000e+00> : vector<10x32xf32>
    %26 = tpu.matmul %24, %23, %cst_10 {dimension_numbers = #tpu.dot_dimension_numbers<[1], [0], [0], [1], [0, 0, 1, 1], [], []>} : vector<10x64xf32>, vector<64x32xf32>, vector<10x32xf32> -> vector<10x32xf32>
    %27 = vector.broadcast %25 : vector<10x1xf32> to vector<10x32xf32>
    %28 = arith.addf %26, %27 : vector<10x32xf32>
    %c0_11 = arith.constant 0 : index
    %c0_12 = arith.constant 0 : index
    %29 = vector.load %arg3[%c0_11, %c0_12] : memref<10x32xf32, #tpu.memory_space<vmem>>, vector<10x32xf32>
    tpu.vector_store %arg3[%c0_11, %c0_12], %28 {strides = array<i32>} : memref<10x32xf32, #tpu.memory_space<vmem>>, vector<10x32xf32>,
    return
  }
}

</mosaic_0001>

<llo_original>
// kernel: text_classifier_cnn_forward_packed.1
$region0: #{text_classifier_cnn_forward_packed.1}
  #allocation0 [shape = 'u32[]', space=smem, size = 0x4, offset = 0x4, fixed_abs, tag = 'smem constant byte address 0x4 - core index']
  #allocation1 [shape = 'u32[144,128]{1,0:T(1,128)}', space=vmem, size = 0x12000, scoped, tag = 'internal scratch']
  %s0 = inlined_call_operand.vmem [shape: s32[64,3], index: 0, kind: input, shape index: {}]
  %s1 = inlined_call_operand.vmem [shape: f32[300,96], index: 1, kind: input, shape index: {}]
  %s2 = inlined_call_operand.vmem [shape: f32[136,64], index: 2, kind: input, shape index: {}]
  %s3 = inlined_call_operand.vmem [shape: f32[10,32], index: 3, kind: output, shape index: {}]
  %s4 = sld [smem:[#allocation0]]
  $region22: #{text_classifier_cnn_forward_packed.1} parent=0
    _
  %s6 = ssub.s32 1, %s4
  %s7 = scalar_select 0, %s6, %s4
  // Predicated region
  $region2: #{text_classifier_cnn_forward_packed.1} parent=0 // pred_check
    _
  $region3: #{text_classifier_cnn_forward_packed.1} parent=0 // pred_check_branch
    %9 = sbr.rel (0) target = $region5
  $region4: #{text_classifier_cnn_forward_packed.1} parent=0 // pred_region
    _
  $region5: #{text_classifier_cnn_forward_packed.1} parent=0 // pred_fallthru
    _
  // Predicated region
  $region6: #{text_classifier_cnn_forward_packed.1} parent=0 // pred_check
    _
  $region7: #{text_classifier_cnn_forward_packed.1} parent=0 // pred_check_branch
    %11 = sbr.rel (0) target = $region9
  $region8: #{text_classifier_cnn_forward_packed.1} parent=0 // pred_region
    _
  $region9: #{text_classifier_cnn_forward_packed.1} parent=0 // pred_fallthru
    _
  // Predicated region
  $region10: #{text_classifier_cnn_forward_packed.1} parent=0 // pred_check
    _
  $region11: #{text_classifier_cnn_forward_packed.1} parent=0 // pred_check_branch
    %13 = sbr.rel (0) target = $region13
  $region12: #{text_classifier_cnn_forward_packed.1} parent=0 // pred_region
    _
  $region13: #{text_classifier_cnn_forward_packed.1} parent=0 // pred_fallthru
    _
  %v14 = vld [vmem:[%s0] sm:$0xff]
  %v15 = vld [vmem:[%s0 + $0x8] sm:$0xff]
  %v16 = vld [vmem:[%s0 + $0x10] sm:$0xff]
  %v17 = vld [vmem:[%s0 + $0x18] sm:$0xff]
  %v18 = vld [vmem:[%s0 + $0x20] sm:$0xff]
  %v19 = vld [vmem:[%s0 + $0x28] sm:$0xff]
  %v20 = vld [vmem:[%s0 + $0x30] sm:$0xff]
  %v21 = vld [vmem:[%s0 + $0x38] sm:$0xff]
  %v22 = vlaneseq
  %v23 = vand.u32 %v22, 127
  %v24 = vadd.s32 %v23, 128
  %v25 = vadd.s32 %v23, 256
  %26 = vset.pattern.permute.xlu0 0
  %27 = vperm.xlu0 %26, %v14
  %v28 = vpop.permute.xlu0 %27
  %29 = vset.pattern.permute.xlu0 0
  %30 = vperm.xlu0 %29, %v15
  %v31 = vpop.permute.xlu0 %30
  %32 = vset.pattern.permute.xlu0 0
  %33 = vperm.xlu0 %32, %v16
  %v34 = vpop.permute.xlu0 %33
  %35 = vset.pattern.permute.xlu0 0
  %36 = vperm.xlu0 %35, %v17
  %v37 = vpop.permute.xlu0 %36
  %38 = vset.pattern.permute.xlu0 0
  %39 = vperm.xlu0 %38, %v18
  %v40 = vpop.permute.xlu0 %39
  %41 = vset.pattern.permute.xlu0 0
  %42 = vperm.xlu0 %41, %v19
  %v43 = vpop.permute.xlu0 %42
  %44 = vset.pattern.permute.xlu0 0
  %45 = vperm.xlu0 %44, %v20
  %v46 = vpop.permute.xlu0 %45
  %47 = vset.pattern.permute.xlu0 0
  %48 = vperm.xlu0 %47, %v21
  %v49 = vpop.permute.xlu0 %48
  %vm50 = vcmp.eq.s32.totalorder %v23, %v28
  %vm51 = vcmp.eq.s32.totalorder %v24, %v28
  %vm52 = vcmp.eq.s32.totalorder %v25, %v28
  %vm53 = vcmp.eq.s32.totalorder %v23, %v31
  %vm54 = vcmp.eq.s32.totalorder %v24, %v31
  %vm55 = vcmp.eq.s32.totalorder %v25, %v31
  %vm56 = vcmp.eq.s32.totalorder %v23, %v34
  %vm57 = vcmp.eq.s32.totalorder %v24, %v34
  %vm58 = vcmp.eq.s32.totalorder %v25, %v34
  %vm59 = vcmp.eq.s32.totalorder %v23, %v37
  %vm60 = vcmp.eq.s32.totalorder %v24, %v37
  %vm61 = vcmp.eq.s32.totalorder %v25, %v37
  %vm62 = vcmp.eq.s32.totalorder %v23, %v40
  %vm63 = vcmp.eq.s32.totalorder %v24, %v40
  %vm64 = vcmp.eq.s32.totalorder %v25, %v40
  %vm65 = vcmp.eq.s32.totalorder %v23, %v43
  %vm66 = vcmp.eq.s32.totalorder %v24, %v43
  %vm67 = vcmp.eq.s32.totalorder %v25, %v43
  %vm68 = vcmp.eq.s32.totalorder %v23, %v46
  %vm69 = vcmp.eq.s32.totalorder %v24, %v46
  %vm70 = vcmp.eq.s32.totalorder %v25, %v46
  %vm71 = vcmp.eq.s32.totalorder %v23, %v49
  %vm72 = vcmp.eq.s32.totalorder %v24, %v49
  %vm73 = vcmp.eq.s32.totalorder %v25, %v49
  %74 = vset.pattern.permute.xlu0 1
  %75 = vperm.xlu0 %74, %v14
  %v76 = vpop.permute.xlu0 %75
  %77 = vset.pattern.permute.xlu0 1
  %78 = vperm.xlu0 %77, %v15
  %v79 = vpop.permute.xlu0 %78
  %80 = vset.pattern.permute.xlu0 1
  %81 = vperm.xlu0 %80, %v16
  %v82 = vpop.permute.xlu0 %81
  %83 = vset.pattern.permute.xlu0 1
  %84 = vperm.xlu0 %83, %v17
  %v85 = vpop.permute.xlu0 %84
  %86 = vset.pattern.permute.xlu0 1
  %87 = vperm.xlu0 %86, %v18
  %v88 = vpop.permute.xlu0 %87
  %89 = vset.pattern.permute.xlu0 1
  %90 = vperm.xlu0 %89, %v19
  %v91 = vpop.permute.xlu0 %90
  %92 = vset.pattern.permute.xlu0 1
  %93 = vperm.xlu0 %92, %v20
  %v94 = vpop.permute.xlu0 %93
  %95 = vset.pattern.permute.xlu0 1
  %96 = vperm.xlu0 %95, %v21
  %v97 = vpop.permute.xlu0 %96
  %vm98 = vcmp.eq.s32.totalorder %v23, %v76
  %vm99 = vcmp.eq.s32.totalorder %v24, %v76
  %vm100 = vcmp.eq.s32.totalorder %v25, %v76
  %vm101 = vcmp.eq.s32.totalorder %v23, %v79
  %vm102 = vcmp.eq.s32.totalorder %v24, %v79
  %vm103 = vcmp.eq.s32.totalorder %v25, %v79
  %vm104 = vcmp.eq.s32.totalorder %v23, %v82
  %vm105 = vcmp.eq.s32.totalorder %v24, %v82
  %vm106 = vcmp.eq.s32.totalorder %v25, %v82
  %vm107 = vcmp.eq.s32.totalorder %v23, %v85
  %vm108 = vcmp.eq.s32.totalorder %v24, %v85
  %vm109 = vcmp.eq.s32.totalorder %v25, %v85
  %vm110 = vcmp.eq.s32.totalorder %v23, %v88
  %vm111 = vcmp.eq.s32.totalorder %v24, %v88
  %vm112 = vcmp.eq.s32.totalorder %v25, %v88
  %vm113 = vcmp.eq.s32.totalorder %v23, %v91
  %vm114 = vcmp.eq.s32.totalorder %v24, %v91
  %vm115 = vcmp.eq.s32.totalorder %v25, %v91
  %vm116 = vcmp.eq.s32.totalorder %v23, %v94
  %vm117 = vcmp.eq.s32.totalorder %v24, %v94
  %vm118 = vcmp.eq.s32.totalorder %v25, %v94
  %vm119 = vcmp.eq.s32.totalorder %v23, %v97
  %vm120 = vcmp.eq.s32.totalorder %v24, %v97
  %vm121 = vcmp.eq.s32.totalorder %v25, %v97
  %vm122 = vmor %vm50, %vm98
  %vm123 = vmor %vm51, %vm99
  %vm124 = vmor %vm52, %vm100
  %vm125 = vmor %vm53, %vm101
  %vm126 = vmor %vm54, %vm102
  %vm127 = vmor %vm55, %vm103
  %vm128 = vmor %vm56, %vm104
  %vm129 = vmor %vm57, %vm105
  %vm130 = vmor %vm58, %vm106
  %vm131 = vmor %vm59, %vm107
  %vm132 = vmor %vm60, %vm108
  %vm133 = vmor %vm61, %vm109
  %vm134 = vmor %vm62, %vm110
  %vm135 = vmor %vm63, %vm111
  %vm136 = vmor %vm64, %vm112
  %vm137 = vmor %vm65, %vm113
  %vm138 = vmor %vm66, %vm114
  %vm139 = vmor %vm67, %vm115
  %vm140 = vmor %vm68, %vm116
  %vm141 = vmor %vm69, %vm117
  %vm142 = vmor %vm70, %vm118
  %vm143 = vmor %vm71, %vm119
  %vm144 = vmor %vm72, %vm120
  %vm145 = vmor %vm73, %vm121
  %146 = vset.pattern.permute.xlu0 2
  %147 = vperm.xlu0 %146, %v14
  %v148 = vpop.permute.xlu0 %147
  %149 = vset.pattern.permute.xlu0 2
  %150 = vperm.xlu0 %149, %v15
  %v151 = vpop.permute.xlu0 %150
  %152 = vset.pattern.permute.xlu0 2
  %153 = vperm.xlu0 %152, %v16
  %v154 = vpop.permute.xlu0 %153
  %155 = vset.pattern.permute.xlu0 2
  %156 = vperm.xlu0 %155, %v17
  %v157 = vpop.permute.xlu0 %156
  %158 = vset.pattern.permute.xlu0 2
  %159 = vperm.xlu0 %158, %v18
  %v160 = vpop.permute.xlu0 %159
  %161 = vset.pattern.permute.xlu0 2
  %162 = vperm.xlu0 %161, %v19
  %v163 = vpop.permute.xlu0 %162
  %164 = vset.pattern.permute.xlu0 2
  %165 = vperm.xlu0 %164, %v20
  %v166 = vpop.permute.xlu0 %165
  %167 = vset.pattern.permute.xlu0 2
  %168 = vperm.xlu0 %167, %v21
  %v169 = vpop.permute.xlu0 %168
  %vm170 = vcmp.eq.s32.totalorder %v23, %v148
  %vm171 = vcmp.eq.s32.totalorder %v24, %v148
  %vm172 = vcmp.eq.s32.totalorder %v25, %v148
  %vm173 = vcmp.eq.s32.totalorder %v23, %v151
  %vm174 = vcmp.eq.s32.totalorder %v24, %v151
  %vm175 = vcmp.eq.s32.totalorder %v25, %v151
  %vm176 = vcmp.eq.s32.totalorder %v23, %v154
  %vm177 = vcmp.eq.s32.totalorder %v24, %v154
  %vm178 = vcmp.eq.s32.totalorder %v25, %v154
  %vm179 = vcmp.eq.s32.totalorder %v23, %v157
  %vm180 = vcmp.eq.s32.totalorder %v24, %v157
  %vm181 = vcmp.eq.s32.totalorder %v25, %v157
  %vm182 = vcmp.eq.s32.totalorder %v23, %v160
  %vm183 = vcmp.eq.s32.totalorder %v24, %v160
  %vm184 = vcmp.eq.s32.totalorder %v25, %v160
  %vm185 = vcmp.eq.s32.totalorder %v23, %v163
  %vm186 = vcmp.eq.s32.totalorder %v24, %v163
  %vm187 = vcmp.eq.s32.totalorder %v25, %v163
  %vm188 = vcmp.eq.s32.totalorder %v23, %v166
  %vm189 = vcmp.eq.s32.totalorder %v24, %v166
  %vm190 = vcmp.eq.s32.totalorder %v25, %v166
  %vm191 = vcmp.eq.s32.totalorder %v23, %v169
  %vm192 = vcmp.eq.s32.totalorder %v24, %v169
  %vm193 = vcmp.eq.s32.totalorder %v25, %v169
  %vm194 = vmor %vm122, %vm170
  %vm195 = vmor %vm123, %vm171
  %vm196 = vmor %vm124, %vm172
  %vm197 = vmor %vm125, %vm173
  %vm198 = vmor %vm126, %vm174
  %vm199 = vmor %vm127, %vm175
  %vm200 = vmor %vm128, %vm176
  %vm201 = vmor %vm129, %vm177
  %vm202 = vmor %vm130, %vm178
  %vm203 = vmor %vm131, %vm179
  %vm204 = vmor %vm132, %vm180
  %vm205 = vmor %vm133, %vm181
  %vm206 = vmor %vm134, %vm182
  %vm207 = vmor %vm135, %vm183
  %vm208 = vmor %vm136, %vm184
  %vm209 = vmor %vm137, %vm185
  %vm210 = vmor %vm138, %vm186
  %vm211 = vmor %vm139, %vm187
  %vm212 = vmor %vm140, %vm188
  %vm213 = vmor %vm141, %vm189
  %vm214 = vmor %vm142, %vm190
  %vm215 = vmor %vm143, %vm191
  %vm216 = vmor %vm144, %vm192
  %vm217 = vmor %vm145, %vm193
  %v218 = vsel %vm194, 1, 0
  %v219 = vsel %vm195, 1, 0
  %v220 = vsel %vm196, 1, 0
  %v221 = vsel %vm197, 1, 0
  %v222 = vsel %vm198, 1, 0
  %v223 = vsel %vm199, 1, 0
  %v224 = vsel %vm200, 1, 0
  %v225 = vsel %vm201, 1, 0
  %v226 = vsel %vm202, 1, 0
  %v227 = vsel %vm203, 1, 0
  %v228 = vsel %vm204, 1, 0
  %v229 = vsel %vm205, 1, 0
  %v230 = vsel %vm206, 1, 0
  %v231 = vsel %vm207, 1, 0
  %v232 = vsel %vm208, 1, 0
  %v233 = vsel %vm209, 1, 0
  %v234 = vsel %vm210, 1, 0
  %v235 = vsel %vm211, 1, 0
  %v236 = vsel %vm212, 1, 0
  %v237 = vsel %vm213, 1, 0
  %v238 = vsel %vm214, 1, 0
  %v239 = vsel %vm215, 1, 0
  %v240 = vsel %vm216, 1, 0
  %v241 = vsel %vm217, 1, 0
  %v242 = vcvt.s32.f32 %v218
  %v243 = vcvt.s32.f32 %v219
  %v244 = vcvt.s32.f32 %v220
  %v245 = vcvt.s32.f32 %v221
  %v246 = vcvt.s32.f32 %v222
  %v247 = vcvt.s32.f32 %v223
  %v248 = vcvt.s32.f32 %v224
  %v249 = vcvt.s32.f32 %v225
  %v250 = vcvt.s32.f32 %v226
  %v251 = vcvt.s32.f32 %v227
  %v252 = vcvt.s32.f32 %v228
  %v253 = vcvt.s32.f32 %v229
  %v254 = vcvt.s32.f32 %v230
  %v255 = vcvt.s32.f32 %v231
  %v256 = vcvt.s32.f32 %v232
  %v257 = vcvt.s32.f32 %v233
  %v258 = vcvt.s32.f32 %v234
  %v259 = vcvt.s32.f32 %v235
  %v260 = vcvt.s32.f32 %v236
  %v261 = vcvt.s32.f32 %v237
  %v262 = vcvt.s32.f32 %v238
  %v263 = vcvt.s32.f32 %v239
  %v264 = vcvt.s32.f32 %v240
  %v265 = vcvt.s32.f32 %v241
  %v266 = vld [vmem:[%s1] sm:$0xff]
  %v267 = vld [vmem:[%s1 + $0x8] sm:$0xff]
  %v268 = vld [vmem:[%s1 + $0x10] sm:$0xff]
  %v269 = vld [vmem:[%s1 + $0x18] sm:$0xff]
  %v270 = vld [vmem:[%s1 + $0x20] sm:$0xff]
  %v271 = vld [vmem:[%s1 + $0x28] sm:$0xff]
  %v272 = vld [vmem:[%s1 + $0x30] sm:$0xff]
  %v273 = vld [vmem:[%s1 + $0x38] sm:$0xff]
  %v274 = vld [vmem:[%s1 + $0x40] sm:$0xff]
  %v275 = vld [vmem:[%s1 + $0x48] sm:$0xff]
  %v276 = vld [vmem:[%s1 + $0x50] sm:$0xff]
  %v277 = vld [vmem:[%s1 + $0x58] sm:$0xff]
  %v278 = vld [vmem:[%s1 + $0x60] sm:$0xff]
  %v279 = vld [vmem:[%s1 + $0x68] sm:$0xff]
  %v280 = vld [vmem:[%s1 + $0x70] sm:$0xff]
  %v281 = vld [vmem:[%s1 + $0x78] sm:$0xff]
  %v282 = vld [vmem:[%s1 + $0x80] sm:$0xff]
  %v283 = vld [vmem:[%s1 + $0x88] sm:$0xff]
  %v284 = vld [vmem:[%s1 + $0x90] sm:$0xff]
  %v285 = vld [vmem:[%s1 + $0x98] sm:$0xff]
  %v286 = vld [vmem:[%s1 + $0xa0] sm:$0xff]
  %v287 = vld [vmem:[%s1 + $0xa8] sm:$0xff]
  %v288 = vld [vmem:[%s1 + $0xb0] sm:$0xff]
  %v289 = vld [vmem:[%s1 + $0xb8] sm:$0xff]
  %v290 = vld [vmem:[%s1 + $0xc0] sm:$0xff]
  %v291 = vld [vmem:[%s1 + $0xc8] sm:$0xff]
  %v292 = vld [vmem:[%s1 + $0xd0] sm:$0xff]
  %v293 = vld [vmem:[%s1 + $0xd8] sm:$0xff]
  %v294 = vld [vmem:[%s1 + $0xe0] sm:$0xff]
  %v295 = vld [vmem:[%s1 + $0xe8] sm:$0xff]
  %v296 = vld [vmem:[%s1 + $0xf0] sm:$0xff]
  %v297 = vld [vmem:[%s1 + $0xf8] sm:$0xff]
  %v298 = vld [vmem:[%s1 + $0x100] sm:$0xff]
  %v299 = vld [vmem:[%s1 + $0x108] sm:$0xff]
  %v300 = vld [vmem:[%s1 + $0x110] sm:$0xff]
  %v301 = vld [vmem:[%s1 + $0x118] sm:$0xff]
  %v302 = vld [vmem:[%s1 + $0x120] sm:$0xff]
  %v303 = vld [vmem:[%s1 + $0x128] sm:$0xf]
  %vm304 = vcmask 359424
  %v306 = vsel %vm304, %v244, 0
  %v309 = vsel %vm304, %v247, 0
  %v312 = vsel %vm304, %v250, 0
  %v315 = vsel %vm304, %v253, 0
  %v318 = vsel %vm304, %v256, 0
  %v321 = vsel %vm304, %v259, 0
  %v324 = vsel %vm304, %v262, 0
  %v327 = vsel %vm304, %v265, 0
  %vm329 = vcmask 1043456
  %v331 = vsel %vm329, %v303, 0
  %333 = vmatprep.subr.mxu0 0.0
  %334 = vmatpush1.msra.mxu0 %v281
  %335 = vmatprep.subr.mxu0 0.0
  %336 = vmatpush1.msra.mxu0 %v280
  %337 = vmatprep.subr.mxu0 0.0
  %338 = vmatpush1.msra.mxu0 %v279
  %339 = vmatprep.subr.mxu0 0.0
  %340 = vmatpush1.msra.mxu0 %v278
  %341 = vmatprep.subr.mxu0 0.0
  %342 = vmatpush1.msra.mxu0 %v277
  %343 = vmatprep.subr.mxu0 0.0
  %344 = vmatpush1.msra.mxu0 %v276
  %345 = vmatprep.subr.mxu0 0.0
  %346 = vmatpush1.msra.mxu0 %v275
  %347 = vmatprep.subr.mxu0 0.0
  %348 = vmatpush1.msra.mxu0 %v274
  %349 = vmatprep.subr.mxu0 0.0
  %350 = vmatpush1.msra.mxu0 %v273
  %351 = vmatprep.subr.mxu0 0.0
  %352 = vmatpush1.msra.mxu0 %v272
  %353 = vmatprep.subr.mxu0 0.0
  %354 = vmatpush1.msra.mxu0 %v271
  %355 = vmatprep.subr.mxu0 0.0
  %356 = vmatpush1.msra.mxu0 %v270
  %357 = vmatprep.subr.mxu0 0.0
  %358 = vmatpush1.msra.mxu0 %v269
  %359 = vmatprep.subr.mxu0 0.0
  %360 = vmatpush1.msra.mxu0 %v268
  %361 = vmatprep.subr.mxu0 0.0
  %362 = vmatpush1.msra.mxu0 %v267
  %363 = vmatprep.subr.mxu0 0.0
  %364 = vmatpush1.msra.mxu0 %v266
  %365 = vmatprep.subr.mxu0 0.0
  %366 = vmatpush2.msra.mxu0 %v297
  %367 = vmatprep.subr.mxu0 0.0
  %368 = vmatpush2.msra.mxu0 %v296
  %369 = vmatprep.subr.mxu0 0.0
  %370 = vmatpush2.msra.mxu0 %v295
  %371 = vmatprep.subr.mxu0 0.0
  %372 = vmatpush2.msra.mxu0 %v294
  %373 = vmatprep.subr.mxu0 0.0
  %374 = vmatpush2.msra.mxu0 %v293
  %375 = vmatprep.subr.mxu0 0.0
  %376 = vmatpush2.msra.mxu0 %v292
  %377 = vmatprep.subr.mxu0 0.0
  %378 = vmatpush2.msra.mxu0 %v291
  %379 = vmatprep.subr.mxu0 0.0
  %380 = vmatpush2.msra.mxu0 %v290
  %381 = vmatprep.subr.mxu0 0.0
  %382 = vmatpush2.msra.mxu0 %v289
  %383 = vmatprep.subr.mxu0 0.0
  %384 = vmatpush2.msra.mxu0 %v288
  %385 = vmatprep.subr.mxu0 0.0
  %386 = vmatpush2.msra.mxu0 %v287
  %387 = vmatprep.subr.mxu0 0.0
  %388 = vmatpush2.msra.mxu0 %v286
  %389 = vmatprep.subr.mxu0 0.0
  %390 = vmatpush2.msra.mxu0 %v285
  %391 = vmatprep.subr.mxu0 0.0
  %392 = vmatpush2.msra.mxu0 %v284
  %393 = vmatprep.subr.mxu0 0.0
  %394 = vmatpush2.msra.mxu0 %v283
  %395 = vmatprep.subr.mxu0 0.0
  %396 = vmatpush2.msra.mxu0 %v282
  %397 = vmatprep.mubr.f32.mxu0 %v243
  %398 = vmatmul.mubr.f32.gmra.mxu0 %v242
  %v399 = vpop.f32.mrf.mxu0
  %v400 = vadd.f32 0.0, %v399
  %v401 = vpop.f32.mrf.mxu0
  %402 = vmatprep.mubr.f32.mxu0 %v246
  %403 = vmatmul.mubr.f32.gmra.mxu0 %v245
  %v404 = vpop.f32.mrf.mxu0
  %v405 = vadd.f32 0.0, %v404
  %v406 = vpop.f32.mrf.mxu0
  %407 = vmatprep.mubr.f32.mxu0 %v249
  %408 = vmatmul.mubr.f32.gmra.mxu0 %v248
  %v409 = vpop.f32.mrf.mxu0
  %v410 = vadd.f32 0.0, %v409
  %v411 = vpop.f32.mrf.mxu0
  %412 = vmatprep.mubr.f32.mxu0 %v252
  %413 = vmatmul.mubr.f32.gmra.mxu0 %v251
  %v414 = vpop.f32.mrf.mxu0
  %v415 = vadd.f32 0.0, %v414
  %v416 = vpop.f32.mrf.mxu0
  %417 = vmatprep.mubr.f32.mxu0 %v255
  %418 = vmatmul.mubr.f32.gmra.mxu0 %v254
  %v419 = vpop.f32.mrf.mxu0
  %v420 = vadd.f32 0.0, %v419
  %v421 = vpop.f32.mrf.mxu0
  %422 = vmatprep.mubr.f32.mxu0 %v258
  %423 = vmatmul.mubr.f32.gmra.mxu0 %v257
  %v424 = vpop.f32.mrf.mxu0
  %v425 = vadd.f32 0.0, %v424
  %v426 = vpop.f32.mrf.mxu0
  %427 = vmatprep.mubr.f32.mxu0 %v261
  %428 = vmatmul.mubr.f32.gmra.mxu0 %v260
  %v429 = vpop.f32.mrf.mxu0
  %v430 = vadd.f32 0.0, %v429
  %v431 = vpop.f32.mrf.mxu0
  %432 = vmatprep.mubr.f32.mxu0 %v264
  %433 = vmatmul.mubr.f32.gmra.mxu0 %v263
  %v434 = vpop.f32.mrf.mxu0
  %v435 = vadd.f32 0.0, %v434
  %v436 = vpop.f32.mrf.mxu0
  %437 = vdwg.mxu0
  %438 = vmatprep.subr.mxu0 0.0
  %439 = vmatpush1.msra.mxu0 0.0
  %440 = vmatprep.subr.mxu0 0.0
  %441 = vmatpush1.msra.mxu0 0.0
  %442 = vmatprep.subr.mxu0 0.0
  %443 = vmatpush1.msra.mxu0 0.0
  %444 = vmatprep.subr.mxu0 0.0
  %445 = vmatpush1.msra.mxu0 0.0
  %446 = vmatprep.subr.mxu0 0.0
  %447 = vmatpush1.msra.mxu0 0.0
  %448 = vmatprep.subr.mxu0 0.0
  %449 = vmatpush1.msra.mxu0 0.0
  %450 = vmatprep.subr.mxu0 0.0
  %451 = vmatpush1.msra.mxu0 0.0
  %452 = vmatprep.subr.mxu0 0.0
  %453 = vmatpush1.msra.mxu0 0.0
  %454 = vmatprep.subr.mxu0 0.0
  %455 = vmatpush1.msra.mxu0 0.0
  %456 = vmatprep.subr.mxu0 0.0
  %457 = vmatpush1.msra.mxu0 0.0
  %458 = vmatprep.subr.mxu0 0.0
  %459 = vmatpush1.msra.mxu0 %v331
  %460 = vmatprep.subr.mxu0 0.0
  %461 = vmatpush1.msra.mxu0 %v302
  %462 = vmatprep.subr.mxu0 0.0
  %463 = vmatpush1.msra.mxu0 %v301
  %464 = vmatprep.subr.mxu0 0.0
  %465 = vmatpush1.msra.mxu0 %v300
  %466 = vmatprep.subr.mxu0 0.0
  %467 = vmatpush1.msra.mxu0 %v299
  %468 = vmatprep.subr.mxu0 0.0
  %469 = vmatpush1.msra.mxu0 %v298
  %470 = vmatprep.subr.mxu0 0.0
  %471 = vmatpush2.msra.mxu0 0.0
  %472 = vmatprep.subr.mxu0 0.0
  %473 = vmatpush2.msra.mxu0 0.0
  %474 = vmatprep.subr.mxu0 0.0
  %475 = vmatpush2.msra.mxu0 0.0
  %476 = vmatprep.subr.mxu0 0.0
  %477 = vmatpush2.msra.mxu0 0.0
  %478 = vmatprep.subr.mxu0 0.0
  %479 = vmatpush2.msra.mxu0 0.0
  %480 = vmatprep.subr.mxu0 0.0
  %481 = vmatpush2.msra.mxu0 0.0
  %482 = vmatprep.subr.mxu0 0.0
  %483 = vmatpush2.msra.mxu0 0.0
  %484 = vmatprep.subr.mxu0 0.0
  %485 = vmatpush2.msra.mxu0 0.0
  %486 = vmatprep.subr.mxu0 0.0
  %487 = vmatpush2.msra.mxu0 0.0
  %488 = vmatprep.subr.mxu0 0.0
  %489 = vmatpush2.msra.mxu0 0.0
  %490 = vmatprep.subr.mxu0 0.0
  %491 = vmatpush2.msra.mxu0 0.0
  %492 = vmatprep.subr.mxu0 0.0
  %493 = vmatpush2.msra.mxu0 0.0
  %494 = vmatprep.subr.mxu0 0.0
  %495 = vmatpush2.msra.mxu0 0.0
  %496 = vmatprep.subr.mxu0 0.0
  %497 = vmatpush2.msra.mxu0 0.0
  %498 = vmatprep.subr.mxu0 0.0
  %499 = vmatpush2.msra.mxu0 0.0
  %500 = vmatprep.subr.mxu0 0.0
  %501 = vmatpush2.msra.mxu0 0.0
  %502 = vmatprep.mubr.f32.mxu0 0.0
  %503 = vmatmul.mubr.f32.gmra.mxu0 %v306
  %v504 = vpop.f32.mrf.mxu0
  %v505 = vadd.f32 %v400, %v504
  %v506 = vpop.f32.mrf.mxu0
  %507 = vmatprep.mubr.f32.mxu0 0.0
  %508 = vmatmul.mubr.f32.gmra.mxu0 %v309
  %v509 = vpop.f32.mrf.mxu0
  %v510 = vadd.f32 %v405, %v509
  %v511 = vpop.f32.mrf.mxu0
  %512 = vmatprep.mubr.f32.mxu0 0.0
  %513 = vmatmul.mubr.f32.gmra.mxu0 %v312
  %v514 = vpop.f32.mrf.mxu0
  %v515 = vadd.f32 %v410, %v514
  %v516 = vpop.f32.mrf.mxu0
  %517 = vmatprep.mubr.f32.mxu0 0.0
  %518 = vmatmul.mubr.f32.gmra.mxu0 %v315
  %v519 = vpop.f32.mrf.mxu0
  %v520 = vadd.f32 %v415, %v519
  %v521 = vpop.f32.mrf.mxu0
  %522 = vmatprep.mubr.f32.mxu0 0.0
  %523 = vmatmul.mubr.f32.gmra.mxu0 %v318
  %v524 = vpop.f32.mrf.mxu0
  %v525 = vadd.f32 %v420, %v524
  %v526 = vpop.f32.mrf.mxu0
  %527 = vmatprep.mubr.f32.mxu0 0.0
  %528 = vmatmul.mubr.f32.gmra.mxu0 %v321
  %v529 = vpop.f32.mrf.mxu0
  %v530 = vadd.f32 %v425, %v529
  %v531 = vpop.f32.mrf.mxu0
  %532 = vmatprep.mubr.f32.mxu0 0.0
  %533 = vmatmul.mubr.f32.gmra.mxu0 %v324
  %v534 = vpop.f32.mrf.mxu0
  %v535 = vadd.f32 %v430, %v534
  %v536 = vpop.f32.mrf.mxu0
  %537 = vmatprep.mubr.f32.mxu0 0.0
  %538 = vmatmul.mubr.f32.gmra.mxu0 %v327
  %v539 = vpop.f32.mrf.mxu0
  %v540 = vadd.f32 %v435, %v539
  %v541 = vpop.f32.mrf.mxu0
  %542 = vdwg.mxu0
  %v543 = vld [vmem:[%s2 + $0x10] sm:$0xff]
  %v544 = vld [vmem:[%s2 + $0x18] sm:$0xff]
  %v545 = vld [vmem:[%s2 + $0x20] sm:$0xff]
  %v546 = vld [vmem:[%s2 + $0x28] sm:$0xff]
  %v547 = vld [vmem:[%s2 + $0x30] sm:$0xff]
  %v548 = vld [vmem:[%s2 + $0x38] sm:$0xff]
  %v549 = vld [vmem:[%s2 + $0x40] sm:$0xff]
  %v550 = vld [vmem:[%s2 + $0x48] sm:$0xff]
  %v551 = vld [vmem:[%s2 + $0x50] sm:$0xff]
  %v552 = vld [vmem:[%s2 + $0x58] sm:$0xff]
  %v553 = vld [vmem:[%s2 + $0x60] sm:$0xff]
  %v554 = vld [vmem:[%s2 + $0x68] sm:$0xff]
  %v555 = vld [vmem:[%s2 + $0x70] sm:$0x1]
  %v556 = vlaneseq
  %v557 = vshrl.u32 %v556, 7
  %v558 = vsub.s32 0, %v557
  %v559 = vrot.slane %v555, %v558
  %vm560 = vcmask 785408
  %v562 = vsel %vm560, %v505, 0
  %v565 = vsel %vm560, %v510, 0
  %v568 = vsel %vm560, %v515, 0
  %v571 = vsel %vm560, %v520, 0
  %v574 = vsel %vm560, %v525, 0
  %v577 = vsel %vm560, %v530, 0
  %v580 = vsel %vm560, %v535, 0
  %v583 = vsel %vm560, %v540, 0
  %585 = vmatprep.subr.mxu0 0.0
  %586 = vmatpush1.msra.mxu0 0.0
  %587 = vmatprep.subr.mxu0 0.0
  %588 = vmatpush1.msra.mxu0 0.0
  %589 = vmatprep.subr.mxu0 0.0
  %590 = vmatpush1.msra.mxu0 0.0
  %591 = vmatprep.subr.mxu0 0.0
  %592 = vmatpush1.msra.mxu0 0.0
  %593 = vmatprep.subr.mxu0 0.0
  %594 = vmatpush1.msra.mxu0 %v554
  %595 = vmatprep.subr.mxu0 0.0
  %596 = vmatpush1.msra.mxu0 %v553
  %597 = vmatprep.subr.mxu0 0.0
  %598 = vmatpush1.msra.mxu0 %v552
  %599 = vmatprep.subr.mxu0 0.0
  %600 = vmatpush1.msra.mxu0 %v551
  %601 = vmatprep.subr.mxu0 0.0
  %602 = vmatpush1.msra.mxu0 %v550
  %603 = vmatprep.subr.mxu0 0.0
  %604 = vmatpush1.msra.mxu0 %v549
  %605 = vmatprep.subr.mxu0 0.0
  %606 = vmatpush1.msra.mxu0 %v548
  %607 = vmatprep.subr.mxu0 0.0
  %608 = vmatpush1.msra.mxu0 %v547
  %609 = vmatprep.subr.mxu0 0.0
  %610 = vmatpush1.msra.mxu0 %v546
  %611 = vmatprep.subr.mxu0 0.0
  %612 = vmatpush1.msra.mxu0 %v545
  %613 = vmatprep.subr.mxu0 0.0
  %614 = vmatpush1.msra.mxu0 %v544
  %615 = vmatprep.subr.mxu0 0.0
  %616 = vmatpush1.msra.mxu0 %v543
  %617 = vmatprep.subr.mxu0 0.0
  %618 = vmatpush2.msra.mxu0 0.0
  %619 = vmatprep.subr.mxu0 0.0
  %620 = vmatpush2.msra.mxu0 0.0
  %621 = vmatprep.subr.mxu0 0.0
  %622 = vmatpush2.msra.mxu0 0.0
  %623 = vmatprep.subr.mxu0 0.0
  %624 = vmatpush2.msra.mxu0 0.0
  %625 = vmatprep.subr.mxu0 0.0
  %626 = vmatpush2.msra.mxu0 0.0
  %627 = vmatprep.subr.mxu0 0.0
  %628 = vmatpush2.msra.mxu0 0.0
  %629 = vmatprep.subr.mxu0 0.0
  %630 = vmatpush2.msra.mxu0 0.0
  %631 = vmatprep.subr.mxu0 0.0
  %632 = vmatpush2.msra.mxu0 0.0
  %633 = vmatprep.subr.mxu0 0.0
  %634 = vmatpush2.msra.mxu0 0.0
  %635 = vmatprep.subr.mxu0 0.0
  %636 = vmatpush2.msra.mxu0 0.0
  %637 = vmatprep.subr.mxu0 0.0
  %638 = vmatpush2.msra.mxu0 0.0
  %639 = vmatprep.subr.mxu0 0.0
  %640 = vmatpush2.msra.mxu0 0.0
  %641 = vmatprep.subr.mxu0 0.0
  %642 = vmatpush2.msra.mxu0 0.0
  %643 = vmatprep.subr.mxu0 0.0
  %644 = vmatpush2.msra.mxu0 0.0
  %645 = vmatprep.subr.mxu0 0.0
  %646 = vmatpush2.msra.mxu0 0.0
  %647 = vmatprep.subr.mxu0 0.0
  %648 = vmatpush2.msra.mxu0 0.0
  %649 = vmatprep.mubr.f32.mxu0 0.0
  %650 = vmatmul.mubr.f32.gmra.mxu0 %v562
  %v651 = vpop.f32.mrf.mxu0
  %v652 = vadd.f32 %v559, %v651
  %v653 = vpop.f32.mrf.mxu0
  %654 = vmatprep.mubr.f32.mxu0 0.0
  %655 = vmatmul.mubr.f32.gmra.mxu0 %v565
  %v656 = vpop.f32.mrf.mxu0
  %v657 = vadd.f32 %v559, %v656
  %v658 = vpop.f32.mrf.mxu0
  %659 = vmatprep.mubr.f32.mxu0 0.0
  %660 = vmatmul.mubr.f32.gmra.mxu0 %v568
  %v661 = vpop.f32.mrf.mxu0
  %v662 = vadd.f32 %v559, %v661
  %v663 = vpop.f32.mrf.mxu0
  %664 = vmatprep.mubr.f32.mxu0 0.0
  %665 = vmatmul.mubr.f32.gmra.mxu0 %v571
  %v666 = vpop.f32.mrf.mxu0
  %v667 = vadd.f32 %v559, %v666
  %v668 = vpop.f32.mrf.mxu0
  %669 = vmatprep.mubr.f32.mxu0 0.0
  %670 = vmatmul.mubr.f32.gmra.mxu0 %v574
  %v671 = vpop.f32.mrf.mxu0
  %v672 = vadd.f32 %v559, %v671
  %v673 = vpop.f32.mrf.mxu0
  %674 = vmatprep.mubr.f32.mxu0 0.0
  %675 = vmatmul.mubr.f32.gmra.mxu0 %v577
  %v676 = vpop.f32.mrf.mxu0
  %v677 = vadd.f32 %v559, %v676
  %v678 = vpop.f32.mrf.mxu0
  %679 = vmatprep.mubr.f32.mxu0 0.0
  %680 = vmatmul.mubr.f32.gmra.mxu0 %v580
  %v681 = vpop.f32.mrf.mxu0
  %v682 = vadd.f32 %v559, %v681
  %v683 = vpop.f32.mrf.mxu0
  %684 = vmatprep.mubr.f32.mxu0 0.0
  %685 = vmatmul.mubr.f32.gmra.mxu0 %v583
  %v686 = vpop.f32.mrf.mxu0
  %v687 = vadd.f32 %v559, %v686
  %v688 = vpop.f32.mrf.mxu0
  %689 = vdwg.mxu0
  %v690 = vmax.f32 %v652, 0.0
  %v691 = vmax.f32 %v657, 0.0
  %v692 = vmax.f32 %v662, 0.0
  %v693 = vmax.f32 %v667, 0.0
  %v694 = vmax.f32 %v672, 0.0
  %v695 = vmax.f32 %v677, 0.0
  %v696 = vmax.f32 %v682, 0.0
  %v697 = vmax.f32 %v687, 0.0
  %v698 = vld [vmem:[%s2] sm:$0xff]
  %v699 = vld [vmem:[%s2 + $0x8] sm:$0x3]
  %v700 = vld [vmem:[%s2 + $0x78] sm:$0xff]
  %v701 = vld [vmem:[%s2 + $0x80] sm:$0x3]
  %703 = vset.pattern.permute.xlu0 0
  %704 = vperm.xlu0 %703, %v700
  %v705 = vpop.permute.xlu0 %704
  %708 = vset.pattern.permute.xlu0 0
  %709 = vperm.xlu0 %708, %v701
  %v710 = vpop.permute.xlu0 %709
  %vm712 = vcmask 523264
  %v714 = vsel %vm712, %v698, 0
  %v717 = vsel %vm712, %v699, 0
  %719 = vmatprep.subr.mxu0 0.0
  %720 = vmatpush1.msra.mxu0 0.0
  %721 = vmatprep.subr.mxu0 0.0
  %722 = vmatpush1.msra.mxu0 0.0
  %723 = vmatprep.subr.mxu0 0.0
  %724 = vmatpush1.msra.mxu0 0.0
  %725 = vmatprep.subr.mxu0 0.0
  %726 = vmatpush1.msra.mxu0 0.0
  %727 = vmatprep.subr.mxu0 0.0
  %728 = vmatpush1.msra.mxu0 0.0
  %729 = vmatprep.subr.mxu0 0.0
  %730 = vmatpush1.msra.mxu0 0.0
  %731 = vmatprep.subr.mxu0 0.0
  %732 = vmatpush1.msra.mxu0 0.0
  %733 = vmatprep.subr.mxu0 0.0
  %734 = vmatpush1.msra.mxu0 0.0
  %735 = vmatprep.subr.mxu0 0.0
  %736 = vmatpush1.msra.mxu0 %v697
  %737 = vmatprep.subr.mxu0 0.0
  %738 = vmatpush1.msra.mxu0 %v696
  %739 = vmatprep.subr.mxu0 0.0
  %740 = vmatpush1.msra.mxu0 %v695
  %741 = vmatprep.subr.mxu0 0.0
  %742 = vmatpush1.msra.mxu0 %v694
  %743 = vmatprep.subr.mxu0 0.0
  %744 = vmatpush1.msra.mxu0 %v693
  %745 = vmatprep.subr.mxu0 0.0
  %746 = vmatpush1.msra.mxu0 %v692
  %747 = vmatprep.subr.mxu0 0.0
  %748 = vmatpush1.msra.mxu0 %v691
  %749 = vmatprep.subr.mxu0 0.0
  %750 = vmatpush1.msra.mxu0 %v690
  %751 = vmatprep.subr.mxu0 0.0
  %752 = vmatpush2.msra.mxu0 0.0
  %753 = vmatprep.subr.mxu0 0.0
  %754 = vmatpush2.msra.mxu0 0.0
  %755 = vmatprep.subr.mxu0 0.0
  %756 = vmatpush2.msra.mxu0 0.0
  %757 = vmatprep.subr.mxu0 0.0
  %758 = vmatpush2.msra.mxu0 0.0
  %759 = vmatprep.subr.mxu0 0.0
  %760 = vmatpush2.msra.mxu0 0.0
  %761 = vmatprep.subr.mxu0 0.0
  %762 = vmatpush2.msra.mxu0 0.0
  %763 = vmatprep.subr.mxu0 0.0
  %764 = vmatpush2.msra.mxu0 0.0
  %765 = vmatprep.subr.mxu0 0.0
  %766 = vmatpush2.msra.mxu0 0.0
  %767 = vmatprep.subr.mxu0 0.0
  %768 = vmatpush2.msra.mxu0 0.0
  %769 = vmatprep.subr.mxu0 0.0
  %770 = vmatpush2.msra.mxu0 0.0
  %771 = vmatprep.subr.mxu0 0.0
  %772 = vmatpush2.msra.mxu0 0.0
  %773 = vmatprep.subr.mxu0 0.0
  %774 = vmatpush2.msra.mxu0 0.0
  %775 = vmatprep.subr.mxu0 0.0
  %776 = vmatpush2.msra.mxu0 0.0
  %777 = vmatprep.subr.mxu0 0.0
  %778 = vmatpush2.msra.mxu0 0.0
  %779 = vmatprep.subr.mxu0 0.0
  %780 = vmatpush2.msra.mxu0 0.0
  %781 = vmatprep.subr.mxu0 0.0
  %782 = vmatpush2.msra.mxu0 0.0
  %783 = vmatprep.mubr.f32.mxu0 0.0
  %784 = vmatmul.mubr.f32.gmra.mxu0 %v714
  %v785 = vpop.f32.mrf.mxu0
  %v786 = vadd.f32 %v705, %v785
  %v787 = vpop.f32.mrf.mxu0
  %788 = vmatprep.mubr.f32.mxu0 0.0
  %789 = vmatmul.mubr.f32.gmra.mxu0 %v717
  %v790 = vpop.f32.mrf.mxu0
  %v791 = vadd.f32 %v710, %v790
  %v792 = vpop.f32.mrf.mxu0
  %793 = vdwg.mxu0
  %vm794 = vcmask 261120
  %795 = vst.msk [vmem:[%s3] sm:$0xff] %vm794, %v786
  %vm796 = vcmask 254976
  %797 = vst.msk [vmem:[%s3 + $0x8] sm:$0x3] %vm796, %v791
  // Predicated region
  $region14: #{text_classifier_cnn_forward_packed.1} parent=0 // pred_check
    _
  $region15: #{text_classifier_cnn_forward_packed.1} parent=0 // pred_check_branch
    %799 = sbr.rel (0) target = $region17
  $region16: #{text_classifier_cnn_forward_packed.1} parent=0 // pred_region
    _
  $region17: #{text_classifier_cnn_forward_packed.1} parent=0 // pred_fallthru
    _
  // Predicated region
  $region18: #{text_classifier_cnn_forward_packed.1} parent=0 // pred_check
    _
  $region19: #{text_classifier_cnn_forward_packed.1} parent=0 // pred_check_branch
    %801 = sbr.rel (0) target = $region21
  $region20: #{text_classifier_cnn_forward_packed.1} parent=0 // pred_region
    _
  $region21: #{text_classifier_cnn_forward_packed.1} parent=0 // pred_fallthru
    _

</llo_original>
